<compile_context>
chip_gen: v7x
topology: tpu7x:2x2x1
jax: 0.10.0
libtpu: 0.0.40
codegen_flags: <defaults>
</compile_context>

<pallas_src>
import functools

import jax
import jax.numpy as jnp
import numpy as np
from jax import lax
from jax.experimental import pallas as pl
from jax.experimental.pallas import tpu as pltpu

_NEG_INF = -1e30


def _vmem_limit(nbytes):
    # Explicit scoped-VMEM cap: 2x the estimated resident set, clamped to
    # [16 MiB, 48 MiB] so it stays inside v7x's 64 MiB physical VMEM while
    # overriding v5e's 16 MiB scoped default.
    return int(min(48 * 1024 * 1024, max(16 * 1024 * 1024, 2 * int(nbytes))))


# ---------------------------------------------------------------------------
# Stage 1: QKV projection (1x1 conv as matmul), computed once per token.
# ---------------------------------------------------------------------------
def _qkv_proj_kernel(x_ref, wq_ref, wk_ref, wv_ref, q_ref, k_ref, v_ref):
    x = x_ref[...]                                        # (TN, C) bf16
    q_ref[...] = jnp.dot(x, wq_ref[...],
                         preferred_element_type=jnp.float32).astype(q_ref.dtype)
    k_ref[...] = jnp.dot(x, wk_ref[...],
                         preferred_element_type=jnp.float32).astype(k_ref.dtype)
    v_ref[...] = jnp.dot(x, wv_ref[...],
                         preferred_element_type=jnp.float32).astype(v_ref.dtype)


# ---------------------------------------------------------------------------
# Stage 2: head-batched flash attention (online softmax over KV tiles).
# ---------------------------------------------------------------------------
def _flash_attn_kernel(q_ref, k_ref, v_ref, o_ref, m_sc, l_sc, acc_sc, *,
                       kv_len, kv_len_padded, block_k):
    ki = pl.program_id(2)

    @pl.when(ki == 0)
    def _():
        m_sc[...] = jnp.full(m_sc.shape, _NEG_INF, dtype=m_sc.dtype)
        l_sc[...] = jnp.zeros(l_sc.shape, dtype=l_sc.dtype)
        acc_sc[...] = jnp.zeros(acc_sc.shape, dtype=acc_sc.dtype)

    q = q_ref[...]                                        # (H, TQ, Ch) bf16
    k = k_ref[...]                                        # (H, TK, Ch) bf16
    # scale is folded into the q weight on the host.
    s = jnp.einsum('hqd,hkd->hqk', q, k,
                   preferred_element_type=jnp.float32)    # (H, TQ, TK) f32

    if kv_len_padded != kv_len:                           # static: mask padded keys
        key_idx = ki * block_k + lax.broadcasted_iota(jnp.int32, s.shape, 2)
        s = jnp.where(key_idx < kv_len, s, _NEG_INF)

    m_prev = m_sc[...]
    m_new = jnp.maximum(m_prev, jnp.max(s, axis=-1, keepdims=True))
    alpha = jnp.exp(m_prev - m_new)
    p = jnp.exp(s - m_new)
    l_sc[...] = alpha * l_sc[...] + jnp.sum(p, axis=-1, keepdims=True)
    acc_sc[...] = alpha * acc_sc[...] + jnp.einsum(
        'hqk,hkd->hqd', p.astype(v_ref.dtype), v_ref[...],
        preferred_element_type=jnp.float32)
    m_sc[...] = m_new

    @pl.when(ki == pl.num_programs(2) - 1)
    def _():
        o_ref[...] = (acc_sc[...] *
                      pl.reciprocal(l_sc[...], approx=True)).astype(o_ref.dtype)


# ---------------------------------------------------------------------------
# Stage 3: output projection + bias, written directly in (C, N) layout.
# ---------------------------------------------------------------------------
def _out_proj_kernel(a_ref, wp_ref, bp_ref, o_ref):
    # out[c, n] = sum_k wp_t[k, c] * a[n, k]   (transposed-LHS dot_general,
    # full C-depth contraction, no wrapper-side transpose pass).
    out = lax.dot_general(wp_ref[...], a_ref[...],
                          (((0,), (1,)), ((), ())),
                          preferred_element_type=jnp.float32)   # (C, TN)
    o_ref[...] = (out + bp_ref[...]).astype(o_ref.dtype)


# ---------------------------------------------------------------------------
# Host-side weight prep: split interleaved qkv weight head-major, transpose
# to (C_in, C_out), fold the attention scale into wq, cast to bf16.
# ---------------------------------------------------------------------------
def _prep_weights(w_qkv, w_proj, b_proj, num_heads, scale):
    three_c, C = w_qkv.shape
    head_dim = C // num_heads
    w = w_qkv.reshape(num_heads, 3, head_dim, C)
    wq = w[:, 0].reshape(C, C)            # rows head-major: h*Ch + c
    wk = w[:, 1].reshape(C, C)
    wv = w[:, 2].reshape(C, C)
    wq_t = (wq.T * scale).astype(jnp.bfloat16)   # scale folded (free)
    wk_t = wk.T.astype(jnp.bfloat16)
    wv_t = wv.T.astype(jnp.bfloat16)
    wp_t = w_proj.T.astype(jnp.bfloat16)
    bp = b_proj.reshape(C, 1).astype(jnp.float32)
    return wq_t, wk_t, wv_t, wp_t, bp


def refine_attention(x, w_qkv, w_proj, b_proj, *, num_heads, q_tile=128):
    """x: (B, N, C).  Returns (B, C, N, 1) to match the PyTorch module."""
    B, N, C = x.shape
    assert C % num_heads == 0
    head_dim = C // num_heads
    scale = float(head_dim) ** (-0.5)

    wq_t, wk_t, wv_t, wp_t, bp = _prep_weights(
        w_qkv, w_proj, b_proj, num_heads, scale)

    # ---- tiling / padding (no full-sequence fallback for awkward N) ----
    tn = q_tile if N >= q_tile else N
    n_pad = -(-N // tn) * tn
    n_tiles = n_pad // tn

    x_p = x.astype(jnp.bfloat16)
    if n_pad != N:
        x_p = jnp.pad(x_p, ((0, 0), (0, n_pad - N), (0, 0)))

    # ---- stage 1: QKV projection (once per token) ----
    qkv_vmem = 2 * (tn * C * 2 + 3 * C * C * 2 + 3 * tn * C * 2)
    q_bnc, k_bnc, v_bnc = pl.pallas_call(
        _qkv_proj_kernel,
        out_shape=[jax.ShapeDtypeStruct((B, n_pad, C), jnp.bfloat16)] * 3,
        grid_spec=pltpu.PrefetchScalarGridSpec(
            num_scalar_prefetch=0,
            grid=(B, n_tiles),
            in_specs=[
                pl.BlockSpec((None, tn, C), lambda b, ni: (b, ni, 0)),
                pl.BlockSpec((C, C), lambda b, ni: (0, 0)),
                pl.BlockSpec((C, C), lambda b, ni: (0, 0)),
                pl.BlockSpec((C, C), lambda b, ni: (0, 0)),
            ],
            out_specs=[
                pl.BlockSpec((None, tn, C), lambda b, ni: (b, ni, 0)),
                pl.BlockSpec((None, tn, C), lambda b, ni: (b, ni, 0)),
                pl.BlockSpec((None, tn, C), lambda b, ni: (b, ni, 0)),
            ],
        ),
        compiler_params=pltpu.CompilerParams(
            dimension_semantics=("parallel", "parallel"),
            vmem_limit_bytes=_vmem_limit(qkv_vmem)),
    )(x_p, wq_t, wk_t, wv_t)

    # head-major split: (B, N, C) -> (B, H, N, Ch)   (cheap O(N*C) XLA pass)
    def to_heads(a):
        return a.reshape(B, n_pad, num_heads, head_dim).transpose(0, 2, 1, 3)
    q_h, k_h, v_h = to_heads(q_bnc), to_heads(k_bnc), to_heads(v_bnc)

    # ---- stage 2: flash attention over KV tiles ----
    attn_kernel = functools.partial(_flash_attn_kernel,
                                    kv_len=N, kv_len_padded=n_pad, block_k=tn)
    attn_vmem = (2 * 4 * (num_heads * tn * head_dim * 2)          # q/k/v/o blocks
                 + 4 * (num_heads * tn * head_dim + 2 * num_heads * tn)  # scratch
                 + 4 * (num_heads * tn * tn))                     # exp tile
    attn_h = pl.pallas_call(
        attn_kernel,
        out_shape=jax.ShapeDtypeStruct((B, num_heads, n_pad, head_dim),
                                       jnp.bfloat16),
        grid_spec=pltpu.PrefetchScalarGridSpec(
            num_scalar_prefetch=0,
            grid=(B, n_tiles, n_tiles),
            in_specs=[
                pl.BlockSpec((None, num_heads, tn, head_dim),
                             lambda b, qi, ki: (b, 0, qi, 0)),
                pl.BlockSpec((None, num_heads, tn, head_dim),
                             lambda b, qi, ki: (b, 0, ki, 0)),
                pl.BlockSpec((None, num_heads, tn, head_dim),
                             lambda b, qi, ki: (b, 0, ki, 0)),
            ],
            out_specs=pl.BlockSpec((None, num_heads, tn, head_dim),
                                   lambda b, qi, ki: (b, 0, qi, 0)),
            scratch_shapes=[
                pltpu.VMEM((num_heads, tn, 1), jnp.float32),        # m
                pltpu.VMEM((num_heads, tn, 1), jnp.float32),        # l
                pltpu.VMEM((num_heads, tn, head_dim), jnp.float32)  # acc
            ]),
        compiler_params=pltpu.CompilerParams(
            dimension_semantics=("parallel", "parallel", "arbitrary"),
            vmem_limit_bytes=_vmem_limit(attn_vmem)),
    )(q_h, k_h, v_h)

    # (B, H, N, Ch) -> (B, N, C) head-major for the output projection
    attn_bnc = attn_h.transpose(0, 2, 1, 3).reshape(B, n_pad, C)

    # ---- stage 3: output projection, emitted in (B, C, N) layout ----
    out_vmem = 2 * (tn * C * 2 + C * C * 2 + C * 4 + C * tn * 4)
    out_bcn = pl.pallas_call(
        _out_proj_kernel,
        out_shape=jax.ShapeDtypeStruct((B, C, n_pad), x.dtype),
        grid_spec=pltpu.PrefetchScalarGridSpec(
            num_scalar_prefetch=0,
            grid=(B, n_tiles),
            in_specs=[
                pl.BlockSpec((None, tn, C), lambda b, ni: (b, ni, 0)),
                pl.BlockSpec((C, C), lambda b, ni: (0, 0)),
                pl.BlockSpec((C, 1), lambda b, ni: (0, 0)),
            ],
            out_specs=pl.BlockSpec((None, C, tn), lambda b, ni: (b, 0, ni)),
        ),
        compiler_params=pltpu.CompilerParams(
            dimension_semantics=("parallel", "parallel"),
            vmem_limit_bytes=_vmem_limit(out_vmem)),
    )(attn_bnc, wp_t, bp)

    if n_pad != N:
        out_bcn = out_bcn[:, :, :N]
    return out_bcn[..., None]                 # (B, C, N, 1)


def refine_attention_ref(x, w_qkv, w_proj, b_proj, *, num_heads):
    """Pure-JAX f32 reference mirroring the PyTorch forward exactly."""
    B, N, C = x.shape
    head_dim = C // num_heads
    scale = float(head_dim) ** (-0.5)
    qkv = jnp.einsum('bnc,oc->bon', x, w_qkv)              # (B, 3C, N)
    qkv = qkv.reshape(B, num_heads, 3 * head_dim, N)
    q, k, v = jnp.split(qkv, 3, axis=2)                    # each (B, H, Ch, N)
    attn = jnp.einsum('bhci,bhcj->bhij', k, q) * scale     # (B, H, N, N)
    attn = jax.nn.softmax(attn, axis=-2)
    out = jnp.einsum('bhci,bhij->bhcj', v, attn)           # (B, H, Ch, N)
    out = out.reshape(B, C, N)
    out = jnp.einsum('bcn,oc->bon', out, w_proj) + b_proj.reshape(1, C, 1)
    return out[..., None]                                   # (B, C, N, 1)


if __name__ == "__main__":
    B, N, C, H = 2, 16, 32, 2

    key = jax.random.PRNGKey(0)
    kx, kq, kp, kb = jax.random.split(key, 4)

    x = jax.random.normal(kx, (B, N, C), dtype=jnp.float32)
    # qkv Conv2d(C, 3C, 1, bias=False) weight, reshaped from (3C, C, 1, 1)
    w_qkv = jax.random.normal(kq, (3 * C, C), dtype=jnp.float32) * 0.1
    # proj Conv2d(C, C, 1) weight + bias
    w_proj = jax.random.normal(kp, (C, C), dtype=jnp.float32) * 0.1
    b_proj = jax.random.normal(kb, (C,), dtype=jnp.float32) * 0.1

    out = refine_attention(x, w_qkv, w_proj, b_proj, num_heads=H)
    out = jax.block_until_ready(out)

    ref = refine_attention_ref(x, w_qkv, w_proj, b_proj, num_heads=H)
    # bf16 MXU operands + approx reciprocal -> relaxed tolerance vs f32 ref.
    np.testing.assert_allclose(np.asarray(out), np.asarray(ref),
                               rtol=2e-2, atol=2e-2)
    assert out.shape == (B, C, N, 1)
    print("KERNEL_OK")
</pallas_src>

<mosaic_0001>
module attributes {stable_mosaic.version = 11 : i64} {
  func.func @_qkv_proj_kernel(%arg0: i32, %arg1: i32, %arg2: memref<1x16x32xbf16, #tpu.memory_space<vmem>>, %arg3: memref<32x32xbf16, #tpu.memory_space<vmem>>, %arg4: memref<32x32xbf16, #tpu.memory_space<vmem>>, %arg5: memref<32x32xbf16, #tpu.memory_space<vmem>>, %arg6: memref<1x16x32xbf16, #tpu.memory_space<vmem>>, %arg7: memref<1x16x32xbf16, #tpu.memory_space<vmem>>, %arg8: memref<1x16x32xbf16, #tpu.memory_space<vmem>>) attributes {dimension_semantics = [#tpu.dimension_semantics<parallel>, #tpu.dimension_semantics<parallel>], iteration_bounds = array<i64: 2, 1>, scalar_prefetch = 0 : i64, scratch_operands = 0 : i64, tpu.core_type = #tpu.core_type<tc>, window_params = [{transform_indices = @transform_0, window_bounds = array<i64: 1, 16, 32>}, {pipeline_mode = #tpu.pipeline_mode<synchronous>, transform_indices = @transform_1, window_bounds = array<i64: 32, 32>}, {pipeline_mode = #tpu.pipeline_mode<synchronous>, transform_indices = @transform_2, window_bounds = array<i64: 32, 32>}, {pipeline_mode = #tpu.pipeline_mode<synchronous>, transform_indices = @transform_3, window_bounds = array<i64: 32, 32>}, {transform_indices = @transform_4, window_bounds = array<i64: 1, 16, 32>}, {transform_indices = @transform_5, window_bounds = array<i64: 1, 16, 32>}, {transform_indices = @transform_6, window_bounds = array<i64: 1, 16, 32>}]} {
    %c0 = arith.constant 0 : index
    %c0_0 = arith.constant 0 : index
    %c0_1 = arith.constant 0 : index
    %0 = vector.load %arg2[%c0, %c0_0, %c0_1] : memref<1x16x32xbf16, #tpu.memory_space<vmem>>, vector<1x16x32xbf16>
    %1 = vector.shape_cast %0 : vector<1x16x32xbf16> to vector<16x32xbf16>
    %c0_2 = arith.constant 0 : index
    %c0_3 = arith.constant 0 : index
    %2 = vector.load %arg3[%c0_2, %c0_3] : memref<32x32xbf16, #tpu.memory_space<vmem>>, vector<32x32xbf16>
    %cst = arith.constant dense<0.000000e+00> : vector<16x32xf32>
    %3 = tpu.matmul %1, %2, %cst {dimension_numbers = #tpu.dot_dimension_numbers<[1], [0], [0], [1], [0, 0, 1, 1], [], []>} : vector<16x32xbf16>, vector<32x32xbf16>, vector<16x32xf32> -> vector<16x32xf32>
    %4 = arith.truncf %3 : vector<16x32xf32> to vector<16x32xbf16>
    %c0_4 = arith.constant 0 : index
    %c0_5 = arith.constant 0 : index
    %c0_6 = arith.constant 0 : index
    %5 = vector.load %arg6[%c0_4, %c0_5, %c0_6] : memref<1x16x32xbf16, #tpu.memory_space<vmem>>, vector<1x16x32xbf16>
    %6 = vector.shape_cast %5 : vector<1x16x32xbf16> to vector<16x32xbf16>
    %7 = vector.shape_cast %4 : vector<16x32xbf16> to vector<1x16x32xbf16>
    tpu.vector_store %arg6[%c0_4, %c0_5, %c0_6], %7 {strides = array<i32>} : memref<1x16x32xbf16, #tpu.memory_space<vmem>>, vector<1x16x32xbf16>,
    %c0_7 = arith.constant 0 : index
    %c0_8 = arith.constant 0 : index
    %8 = vector.load %arg4[%c0_7, %c0_8] : memref<32x32xbf16, #tpu.memory_space<vmem>>, vector<32x32xbf16>
    %cst_9 = arith.constant dense<0.000000e+00> : vector<16x32xf32>
    %9 = tpu.matmul %1, %8, %cst_9 {dimension_numbers = #tpu.dot_dimension_numbers<[1], [0], [0], [1], [0, 0, 1, 1], [], []>} : vector<16x32xbf16>, vector<32x32xbf16>, vector<16x32xf32> -> vector<16x32xf32>
    %10 = arith.truncf %9 : vector<16x32xf32> to vector<16x32xbf16>
    %c0_10 = arith.constant 0 : index
    %c0_11 = arith.constant 0 : index
    %c0_12 = arith.constant 0 : index
    %11 = vector.load %arg7[%c0_10, %c0_11, %c0_12] : memref<1x16x32xbf16, #tpu.memory_space<vmem>>, vector<1x16x32xbf16>
    %12 = vector.shape_cast %11 : vector<1x16x32xbf16> to vector<16x32xbf16>
    %13 = vector.shape_cast %10 : vector<16x32xbf16> to vector<1x16x32xbf16>
    tpu.vector_store %arg7[%c0_10, %c0_11, %c0_12], %13 {strides = array<i32>} : memref<1x16x32xbf16, #tpu.memory_space<vmem>>, vector<1x16x32xbf16>,
    %c0_13 = arith.constant 0 : index
    %c0_14 = arith.constant 0 : index
    %14 = vector.load %arg5[%c0_13, %c0_14] : memref<32x32xbf16, #tpu.memory_space<vmem>>, vector<32x32xbf16>
    %cst_15 = arith.constant dense<0.000000e+00> : vector<16x32xf32>
    %15 = tpu.matmul %1, %14, %cst_15 {dimension_numbers = #tpu.dot_dimension_numbers<[1], [0], [0], [1], [0, 0, 1, 1], [], []>} : vector<16x32xbf16>, vector<32x32xbf16>, vector<16x32xf32> -> vector<16x32xf32>
    %16 = arith.truncf %15 : vector<16x32xf32> to vector<16x32xbf16>
    %c0_16 = arith.constant 0 : index
    %c0_17 = arith.constant 0 : index
    %c0_18 = arith.constant 0 : index
    %17 = vector.load %arg8[%c0_16, %c0_17, %c0_18] : memref<1x16x32xbf16, #tpu.memory_space<vmem>>, vector<1x16x32xbf16>
    %18 = vector.shape_cast %17 : vector<1x16x32xbf16> to vector<16x32xbf16>
    %19 = vector.shape_cast %16 : vector<16x32xbf16> to vector<1x16x32xbf16>
    tpu.vector_store %arg8[%c0_16, %c0_17, %c0_18], %19 {strides = array<i32>} : memref<1x16x32xbf16, #tpu.memory_space<vmem>>, vector<1x16x32xbf16>,
    return
  }
  func.func @transform_0(%arg0: i32, %arg1: i32) -> (i32, i32, i32) {
    %c0_i32 = arith.constant 0 : i32
    %c0_i32_0 = arith.constant 0 : i32
    return %arg0, %arg1, %c0_i32 : i32, i32, i32
  }
  func.func @transform_1(%arg0: i32, %arg1: i32) -> (i32, i32) {
    %c0_i32 = arith.constant 0 : i32
    %c0_i32_0 = arith.constant 0 : i32
    %c0_i32_1 = arith.constant 0 : i32
    return %c0_i32, %c0_i32_0 : i32, i32
  }
  func.func @transform_2(%arg0: i32, %arg1: i32) -> (i32, i32) {
    %c0_i32 = arith.constant 0 : i32
    %c0_i32_0 = arith.constant 0 : i32
    %c0_i32_1 = arith.constant 0 : i32
    return %c0_i32, %c0_i32_0 : i32, i32
  }
  func.func @transform_3(%arg0: i32, %arg1: i32) -> (i32, i32) {
    %c0_i32 = arith.constant 0 : i32
    %c0_i32_0 = arith.constant 0 : i32
    %c0_i32_1 = arith.constant 0 : i32
    return %c0_i32, %c0_i32_0 : i32, i32
  }
  func.func @transform_4(%arg0: i32, %arg1: i32) -> (i32, i32, i32) {
    %c0_i32 = arith.constant 0 : i32
    %c0_i32_0 = arith.constant 0 : i32
    return %arg0, %arg1, %c0_i32 : i32, i32, i32
  }
  func.func @transform_5(%arg0: i32, %arg1: i32) -> (i32, i32, i32) {
    %c0_i32 = arith.constant 0 : i32
    %c0_i32_0 = arith.constant 0 : i32
    return %arg0, %arg1, %c0_i32 : i32, i32, i32
  }
  func.func @transform_6(%arg0: i32, %arg1: i32) -> (i32, i32, i32) {
    %c0_i32 = arith.constant 0 : i32
    %c0_i32_0 = arith.constant 0 : i32
    return %arg0, %arg1, %c0_i32 : i32, i32, i32
  }
}

</mosaic_0001>

<llo_original>
// kernel: tpu_custom_call.1
$region0: #{tpu_custom_call.1}
  #allocation0 [shape = 'u32[]', space=smem, size = 0x4, offset = 0x4, fixed_abs, tag = 'smem constant byte address 0x4 - core index']
  #allocation1 [shape = 'u32[144,128]{1,0:T(1,128)}', space=vmem, size = 0x12000, scoped, tag = 'internal scratch']
  %s0 = inlined_call_operand.hbm [shape: bf16[2,16,32], index: 0, kind: input, shape index: {}]
  %s1 = inlined_call_operand.hbm [shape: bf16[32,32], index: 1, kind: input, shape index: {}]
  %s2 = inlined_call_operand.hbm [shape: bf16[32,32], index: 2, kind: input, shape index: {}]
  %s3 = inlined_call_operand.hbm [shape: bf16[32,32], index: 3, kind: input, shape index: {}]
  %s4 = inlined_call_operand.hbm [shape: bf16[2,16,32], index: 4, kind: output, shape index: {0}]
  %s5 = inlined_call_operand.hbm [shape: bf16[2,16,32], index: 5, kind: output, shape index: {1}]
  %s6 = inlined_call_operand.hbm [shape: bf16[2,16,32], index: 6, kind: output, shape index: {2}]
  %7 = xla_tuple %s4, %s5, %s6
  %s8 = sld [smem:[#allocation0]]
  $region81: #{tpu_custom_call.1} parent=0
    _
  %s10 = ssub.s32 1, %s8
  %s11 = scalar_select 0, %s10, %s8
  $region1: #{tpu_custom_call.1} parent=0
    #allocation2 [shape = 'u8[8192]{0}', space=vmem, size = 0x2000, scoped, tag = 'input window, operand 0']
    #allocation3 [shape = 's32[2]{0}', space=sflag, size = 0x8, scoped, tag = 'scoped memory for tpu_custom_call.1']
    #allocation4 [shape = 's32[2]{0}', space=sflag, size = 0x8, scoped, tag = 'scoped memory for tpu_custom_call.1']
    #allocation5 [shape = 'u8[8192]{0}', space=vmem, size = 0x2000, scoped, tag = 'input window, operand 1, single buffered']
    #allocation6 [shape = 's32[1]{0}', space=sflag, size = 0x4, scoped, tag = 'scoped memory for tpu_custom_call.1']
    #allocation7 [shape = 'u8[8192]{0}', space=vmem, size = 0x2000, scoped, tag = 'input window, operand 2, single buffered']
    #allocation8 [shape = 'u8[8192]{0}', space=vmem, size = 0x2000, scoped, tag = 'input window, operand 3, single buffered']
    #allocation9 [shape = 's32[1]{0}', space=sflag, size = 0x4, scoped, tag = 'scoped memory for tpu_custom_call.1']
    #allocation10 [shape = 'u8[8192]{0}', space=vmem, size = 0x2000, scoped, tag = 'output window, operand 0']
    #allocation11 [shape = 'u8[8192]{0}', space=vmem, size = 0x2000, scoped, tag = 'output window, operand 1']
    #allocation12 [shape = 's32[2]{0}', space=sflag, size = 0x8, scoped, tag = 'scoped memory for tpu_custom_call.1']
    #allocation13 [shape = 'u8[8192]{0}', space=vmem, size = 0x2000, scoped, tag = 'output window, operand 2']
    %12 = vsyncpa [#allocation3], 0
    %s13 = scalar_lea.sflag [#allocation3], 1
    %14 = vsyncpa %s13, 0
    %15 = vsyncpa [#allocation6], 0
    %16 = vsyncpa [#allocation9], 0
    %17 = vsyncpa [#allocation4], 0
    %s18 = scalar_lea.sflag [#allocation4], 1
    %19 = vsyncpa %s18, 0
    %20 = vsyncpa [#allocation12], 0
    %s21 = scalar_lea.sflag [#allocation12], 1
    %22 = vsyncpa %s21, 0
    loop: start=0, step=1, limit=4
    $region2: #{tpu_custom_call.1} parent=1 // loop_pre_header
      _
    $region3: #{tpu_custom_call.1} parent=1 // loop_header
      %s24 = sphi 0, %s28
      %p25 = scmp.ge.s32.totalorder %s24, 4
      %s31 = sphi 0, %s43
      %s32 = sphi 0, %s39
      %s33 = sphi 0, %s31
      %s34 = sphi 0, %s32
      %s35 = sphi 0, %s33
      %s36 = sphi 0, %s34
      %s48 = sphi 0, %s50
      %s51 = sphi 0, %s48
      %s52 = sphi 0, %s51
      %s68 = sphi 0, %s52
      %s72 = sphi 0, %s72
      %s74 = sphi 0, %s72
      %s75 = sphi 0, %s74
      %s89 = sphi 0, %s75
      %s93 = sphi 0, %s93
      %s95 = sphi 0, %s93
      %s96 = sphi 0, %s95
      %s110 = sphi 0, %s96
      %s114 = sphi 0, %s114
      %s116 = sphi 0, %s114
      %s117 = sphi 0, %s116
      %s131 = sphi 0, %s117
      %s139 = sphi 0, %s141
      %s142 = sphi 0, %s139
      %s143 = sphi 0, %s142
      %s159 = sphi 0, %s143
      %s167 = sphi 0, %s169
      %s170 = sphi 0, %s167
      %s171 = sphi 0, %s170
      %s187 = sphi 0, %s171
      %s195 = sphi 0, %s197
      %s198 = sphi 0, %s195
      %s199 = sphi 0, %s198
      %s215 = sphi 0, %s199
    $region4: #{tpu_custom_call.1} parent=1 // loop_header_branch
      %27 = sbr.rel (%p25) target = $region8
    $region5: #{tpu_custom_call.1} parent=1 // loop_body
      %s29 = ssub.s32 %s24, 1
      %s30 = ssub.s32 %s24, 2
      %s37 = sadd.s32 1, %s32
      %p38 = scmp.ge.s32.totalorder %s37, 1
      %s39 = scalar_select %p38, 0, %s37
      %s40 = sadd.s32 1, %s31
      %s41 = scalar_select %p38, %s40, %s31
      %p42 = scmp.ge.s32.totalorder %s41, 2
      %s43 = scalar_select %p42, 0, %s41
      %s44 = ssub.s32 %s31, %s43
      %s45 = ssub.s32 %s32, %s39
      %s46 = sor.u32 %s44, %s45
      %p47 = scmp.eq.s32.totalorder %s46, 0
      %s49 = sadd.s32 %s48, 1
      %s50 = scalar_select %p47, %s48, %s49
      %p53 = pneg %p47
      %p54 = scmp.eq.s32.totalorder %s24, 1
      %p55 = por %p53, %p54
      %p56 = scmp.ne.s32.totalorder %s48, %s51
      %p57 = scmp.eq.s32.totalorder %s24, 0
      %p58 = por %p56, %p57
      %p59 = scmp.ne.s32.totalorder %s48, %s51
      %p60 = scmp.eq.s32.totalorder %s29, 1
      %p61 = por %p59, %p60
      %p62 = scmp.ne.s32.totalorder %s51, %s52
      %p63 = scmp.eq.s32.totalorder %s29, 0
      %p64 = por %p62, %p63
      %p65 = scmp.ne.s32.totalorder %s51, %s52
      %p66 = scmp.eq.s32.totalorder %s30, 1
      %p67 = por %p65, %p66
      %p69 = scmp.ne.s32.totalorder %s52, %s68
      %p70 = scmp.eq.s32.totalorder %s30, 0
      %p71 = por %p69, %p70
      %s73 = sadd.s32 %s72, 1
      %p76 = scmp.eq.s32.totalorder %s24, 1
      %p77 = scmp.ne.s32.totalorder %s72, %s74
      %p78 = scmp.eq.s32.totalorder %s24, 0
      %p79 = por %p77, %p78
      %p80 = scmp.ne.s32.totalorder %s72, %s74
      %p81 = scmp.eq.s32.totalorder %s29, 1
      %p82 = por %p80, %p81
      %p83 = scmp.ne.s32.totalorder %s74, %s75
      %p84 = scmp.eq.s32.totalorder %s29, 0
      %p85 = por %p83, %p84
      %p86 = scmp.ne.s32.totalorder %s74, %s75
      %p87 = scmp.eq.s32.totalorder %s30, 1
      %p88 = por %p86, %p87
      %p90 = scmp.ne.s32.totalorder %s75, %s89
      %p91 = scmp.eq.s32.totalorder %s30, 0
      %p92 = por %p90, %p91
      %s94 = sadd.s32 %s93, 1
      %p97 = scmp.eq.s32.totalorder %s24, 1
      %p98 = scmp.ne.s32.totalorder %s93, %s95
      %p99 = scmp.eq.s32.totalorder %s24, 0
      %p100 = por %p98, %p99
      %p101 = scmp.ne.s32.totalorder %s93, %s95
      %p102 = scmp.eq.s32.totalorder %s29, 1
      %p103 = por %p101, %p102
      %p104 = scmp.ne.s32.totalorder %s95, %s96
      %p105 = scmp.eq.s32.totalorder %s29, 0
      %p106 = por %p104, %p105
      %p107 = scmp.ne.s32.totalorder %s95, %s96
      %p108 = scmp.eq.s32.totalorder %s30, 1
      %p109 = por %p107, %p108
      %p111 = scmp.ne.s32.totalorder %s96, %s110
      %p112 = scmp.eq.s32.totalorder %s30, 0
      %p113 = por %p111, %p112
      %s115 = sadd.s32 %s114, 1
      %p118 = scmp.eq.s32.totalorder %s24, 1
      %p119 = scmp.ne.s32.totalorder %s114, %s116
      %p120 = scmp.eq.s32.totalorder %s24, 0
      %p121 = por %p119, %p120
      %p122 = scmp.ne.s32.totalorder %s114, %s116
      %p123 = scmp.eq.s32.totalorder %s29, 1
      %p124 = por %p122, %p123
      %p125 = scmp.ne.s32.totalorder %s116, %s117
      %p126 = scmp.eq.s32.totalorder %s29, 0
      %p127 = por %p125, %p126
      %p128 = scmp.ne.s32.totalorder %s116, %s117
      %p129 = scmp.eq.s32.totalorder %s30, 1
      %p130 = por %p128, %p129
      %p132 = scmp.ne.s32.totalorder %s117, %s131
      %p133 = scmp.eq.s32.totalorder %s30, 0
      %p134 = por %p132, %p133
      %s135 = ssub.s32 %s31, %s43
      %s136 = ssub.s32 %s32, %s39
      %s137 = sor.u32 %s135, %s136
      %p138 = scmp.eq.s32.totalorder %s137, 0
      %s140 = sadd.s32 %s139, 1
      %s141 = scalar_select %p138, %s139, %s140
      %p144 = pneg %p138
      %p145 = scmp.eq.s32.totalorder %s24, 1
      %p146 = por %p144, %p145
      %p147 = scmp.ne.s32.totalorder %s139, %s142
      %p148 = scmp.eq.s32.totalorder %s24, 0
      %p149 = por %p147, %p148
      %p150 = scmp.ne.s32.totalorder %s139, %s142
      %p151 = scmp.eq.s32.totalorder %s29, 1
      %p152 = por %p150, %p151
      %p153 = scmp.ne.s32.totalorder %s142, %s143
      %p154 = scmp.eq.s32.totalorder %s29, 0
      %p155 = por %p153, %p154
      %p156 = scmp.ne.s32.totalorder %s142, %s143
      %p157 = scmp.eq.s32.totalorder %s30, 1
      %p158 = por %p156, %p157
      %p160 = scmp.ne.s32.totalorder %s143, %s159
      %p161 = scmp.eq.s32.totalorder %s30, 0
      %p162 = por %p160, %p161
      %s163 = ssub.s32 %s31, %s43
      %s164 = ssub.s32 %s32, %s39
      %s165 = sor.u32 %s163, %s164
      %p166 = scmp.eq.s32.totalorder %s165, 0
      %s168 = sadd.s32 %s167, 1
      %s169 = scalar_select %p166, %s167, %s168
      %p172 = pneg %p166
      %p173 = scmp.eq.s32.totalorder %s24, 1
      %p174 = por %p172, %p173
      %p175 = scmp.ne.s32.totalorder %s167, %s170
      %p176 = scmp.eq.s32.totalorder %s24, 0
      %p177 = por %p175, %p176
      %p178 = scmp.ne.s32.totalorder %s167, %s170
      %p179 = scmp.eq.s32.totalorder %s29, 1
      %p180 = por %p178, %p179
      %p181 = scmp.ne.s32.totalorder %s170, %s171
      %p182 = scmp.eq.s32.totalorder %s29, 0
      %p183 = por %p181, %p182
      %p184 = scmp.ne.s32.totalorder %s170, %s171
      %p185 = scmp.eq.s32.totalorder %s30, 1
      %p186 = por %p184, %p185
      %p188 = scmp.ne.s32.totalorder %s171, %s187
      %p189 = scmp.eq.s32.totalorder %s30, 0
      %p190 = por %p188, %p189
      %s191 = ssub.s32 %s31, %s43
      %s192 = ssub.s32 %s32, %s39
      %s193 = sor.u32 %s191, %s192
      %p194 = scmp.eq.s32.totalorder %s193, 0
      %s196 = sadd.s32 %s195, 1
      %s197 = scalar_select %p194, %s195, %s196
      %p200 = pneg %p194
      %p201 = scmp.eq.s32.totalorder %s24, 1
      %p202 = por %p200, %p201
      %p203 = scmp.ne.s32.totalorder %s195, %s198
      %p204 = scmp.eq.s32.totalorder %s24, 0
      %p205 = por %p203, %p204
      %p206 = scmp.ne.s32.totalorder %s195, %s198
      %p207 = scmp.eq.s32.totalorder %s29, 1
      %p208 = por %p206, %p207
      %p209 = scmp.ne.s32.totalorder %s198, %s199
      %p210 = scmp.eq.s32.totalorder %s29, 0
      %p211 = por %p209, %p210
      %p212 = scmp.ne.s32.totalorder %s198, %s199
      %p213 = scmp.eq.s32.totalorder %s30, 1
      %p214 = por %p212, %p213
      %p216 = scmp.ne.s32.totalorder %s199, %s215
      %p217 = scmp.eq.s32.totalorder %s30, 0
      %p218 = por %p216, %p217
      %p219 = scmp.le.s32.totalorder 1, %s24
      %p220 = scmp.lt.s32.totalorder %s24, 3
      %p221 = pnand %p219, %p220
      %p222 = pneg %p221
      // Predicated region
      $region9: #{tpu_custom_call.1} parent=5 // pred_check
        _
      $region10: #{tpu_custom_call.1} parent=5 // pred_check_branch
        %224 = sbr.rel (%p221) target = $region12
      $region11: #{tpu_custom_call.1} parent=5 // pred_region
        %s225 = ssub.s32 %s24, 1
        // Predicated region
        $region13: #{tpu_custom_call.1} parent=11 // pred_check
          %p226 = pneg %p85
        $region14: #{tpu_custom_call.1} parent=11 // pred_check_branch
          %228 = sbr.rel (%p226) target = $region16
        $region15: #{tpu_custom_call.1} parent=11 // pred_region
          %s230 = ssub.s32 256, 256
          %231 = vsyncadd [#allocation6], %s230
          %s232 = sshll.u32 [#allocation5], 4
          %s233 = int_to_ptr.vmem [resolvable:$true] %s232
          %238 = dma.hbm_to_vmem [thread:$0]  %s1, 256, %s233, [#allocation6], 64, 64, 4
        $region16: #{tpu_custom_call.1} parent=11 // pred_fallthru
          _
        // Predicated region
        $region17: #{tpu_custom_call.1} parent=11 // pred_check
          %p239 = pneg %p106
        $region18: #{tpu_custom_call.1} parent=11 // pred_check_branch
          %241 = sbr.rel (%p239) target = $region20
        $region19: #{tpu_custom_call.1} parent=11 // pred_region
          %s243 = ssub.s32 256, 256
          %244 = vsyncadd [#allocation6], %s243
          %s245 = sshll.u32 [#allocation7], 4
          %s246 = int_to_ptr.vmem [resolvable:$true] %s245
          %251 = dma.hbm_to_vmem [thread:$0]  %s2, 256, %s246, [#allocation6], 64, 64, 4
        $region20: #{tpu_custom_call.1} parent=11 // pred_fallthru
          _
        // Predicated region
        $region21: #{tpu_custom_call.1} parent=11 // pred_check
          %p252 = pneg %p127
        $region22: #{tpu_custom_call.1} parent=11 // pred_check_branch
          %254 = sbr.rel (%p252) target = $region24
        $region23: #{tpu_custom_call.1} parent=11 // pred_region
          %s256 = ssub.s32 256, 256
          %257 = vsyncadd [#allocation9], %s256
          %s258 = sshll.u32 [#allocation8], 4
          %s259 = int_to_ptr.vmem [resolvable:$true] %s258
          %264 = dma.hbm_to_vmem [thread:$0]  %s3, 256, %s259, [#allocation9], 64, 64, 4
        $region24: #{tpu_custom_call.1} parent=11 // pred_fallthru
          _
      $region12: #{tpu_custom_call.1} parent=5 // pred_fallthru
        _
      %p265 = scmp.lt.s32.totalorder %s24, 2
      // Predicated region
      $region25: #{tpu_custom_call.1} parent=5 // pred_check
        %p266 = pneg %p265
      $region26: #{tpu_custom_call.1} parent=5 // pred_check_branch
        %268 = sbr.rel (%p266) target = $region28
      $region27: #{tpu_custom_call.1} parent=5 // pred_region
        // Predicated region
        $region29: #{tpu_custom_call.1} parent=27 // pred_check
          %p269 = pneg %p58
        $region30: #{tpu_custom_call.1} parent=27 // pred_check_branch
          %271 = sbr.rel (%p269) target = $region32
        $region31: #{tpu_custom_call.1} parent=27 // pred_region
          %s272 = sand.u32 %s48, 1
          %s273 = scalar_lea.sflag [#allocation3], %s272
          %s274 = sand.u32 %s48, 1
          %s275 = smul.addr %s274, 8
          %s276 = scalar_lea.vmem [#allocation2], %s275
          %s277 = smul.u32 2, %s32
          %s279 = ssub.s32 128, 128
          %280 = vsyncadd %s273, %s279
          %s281 = smul.addr %s31, 2
          %s282 = sadd.s32 %s277, %s281
          %s283 = smul.addr %s282, 64
          %s284 = scalar_lea.hbm %s0, %s283
          %s285 = sshll.u32 %s276, 4
          %s286 = int_to_ptr.vmem [resolvable:$true] %s285
          %291 = dma.hbm_to_vmem [thread:$0]  %s284, 128, %s286, %s273, 64, 64, 4
        $region32: #{tpu_custom_call.1} parent=27 // pred_fallthru
          _
      $region28: #{tpu_custom_call.1} parent=5 // pred_fallthru
        _
      %p292 = scmp.le.s32.totalorder 1, %s24
      %p293 = scmp.lt.s32.totalorder %s24, 3
      %p294 = pnand %p292, %p293
      %p295 = pneg %p294
      // Predicated region
      $region33: #{tpu_custom_call.1} parent=5 // pred_check
        _
      $region34: #{tpu_custom_call.1} parent=5 // pred_check_branch
        %297 = sbr.rel (%p294) target = $region36
      $region35: #{tpu_custom_call.1} parent=5 // pred_region
        %s298 = ssub.s32 %s24, 1
        %s299 = sand.u32 %s51, 1
        %s300 = scalar_lea.sflag [#allocation3], %s299
        %s301 = sand.u32 %s51, 1
        %s302 = smul.addr %s301, 8
        %s303 = scalar_lea.vmem [#allocation2], %s302
        // Predicated region
        $region37: #{tpu_custom_call.1} parent=35 // pred_check
          %p304 = pneg %p64
        $region38: #{tpu_custom_call.1} parent=35 // pred_check_branch
          %306 = sbr.rel (%p304) target = $region40
        $region39: #{tpu_custom_call.1} parent=35 // pred_region
          %307 = dma.done %s300, 128
        $region40: #{tpu_custom_call.1} parent=35 // pred_fallthru
          _
        // Predicated region
        $region41: #{tpu_custom_call.1} parent=35 // pred_check
          %p308 = pneg %p85
        $region42: #{tpu_custom_call.1} parent=35 // pred_check_branch
          %310 = sbr.rel (%p308) target = $region44
        $region43: #{tpu_custom_call.1} parent=35 // pred_region
          %311 = dma.done [#allocation6], 256
        $region44: #{tpu_custom_call.1} parent=35 // pred_fallthru
          _
        // Predicated region
        $region45: #{tpu_custom_call.1} parent=35 // pred_check
          %p312 = pneg %p106
        $region46: #{tpu_custom_call.1} parent=35 // pred_check_branch
          %314 = sbr.rel (%p312) target = $region48
        $region47: #{tpu_custom_call.1} parent=35 // pred_region
          %315 = dma.done [#allocation6], 256
        $region48: #{tpu_custom_call.1} parent=35 // pred_fallthru
          _
        // Predicated region
        $region49: #{tpu_custom_call.1} parent=35 // pred_check
          %p316 = pneg %p127
        $region50: #{tpu_custom_call.1} parent=35 // pred_check_branch
          %318 = sbr.rel (%p316) target = $region52
        $region51: #{tpu_custom_call.1} parent=35 // pred_region
          %319 = dma.done [#allocation9], 256
        $region52: #{tpu_custom_call.1} parent=35 // pred_fallthru
          _
        %s320 = sand.u32 %s51, 1
        %s321 = scalar_lea.sflag [#allocation3], %s320
        %s322 = sand.u32 %s51, 1
        %s323 = smul.addr %s322, 8
        %s324 = scalar_lea.vmem [#allocation2], %s323
        %p325 = pneg %p64
        %p326 = pneg %p61
        %p327 = pneg %p85
        %p328 = pneg %p82
        %p329 = pneg %p106
        %p330 = pneg %p103
        %p331 = pneg %p127
        %p332 = pneg %p124
        %p333 = pneg %p155
        %p334 = pneg %p152
        %s335 = sand.u32 %s142, 1
        %s336 = scalar_lea.sflag [#allocation4], %s335
        %s337 = sand.u32 %s142, 1
        %s338 = smul.addr %s337, 8
        %s339 = scalar_lea.vmem [#allocation10], %s338
        %p340 = pneg %p183
        %p341 = pneg %p180
        %s342 = sand.u32 %s29, 1
        %s343 = scalar_lea.sflag [#allocation12], %s342
        %s344 = sand.u32 %s170, 1
        %s345 = smul.addr %s344, 8
        %s346 = scalar_lea.vmem [#allocation11], %s345
        %p347 = pneg %p211
        %p348 = pneg %p208
        %s349 = sand.u32 %s29, 1
        %s350 = scalar_lea.sflag [#allocation12], %s349
        %s351 = sand.u32 %s198, 1
        %s352 = smul.addr %s351, 8
        %s353 = scalar_lea.vmem [#allocation13], %s352
        %s354 = smul.u32 2, %s34
        %s355 = smul.u32 2, %s34
        %s356 = smul.u32 2, %s34
        %s357 = smul.u32 2, %s34
        %v359 = vld [vmem:[%s303] sm:$0xf]
        %v360 = vld [vmem:[%s303 + $0x4] sm:$0xf]
        %v361 = vld [vmem:[#allocation5] sm:$0xf]
        %v362 = vld [vmem:[#allocation5 + $0x4] sm:$0xf]
        %v363 = vld [vmem:[#allocation5 + $0x8] sm:$0xf]
        %v364 = vld [vmem:[#allocation5 + $0xc] sm:$0xf]
        %v367 = vunpack.c.l.b16 %v359
        %v368 = vunpack.c.l.b16 %v360
        %v369 = vpack.c.b16 %v368, %v367
        %v374 = vunpack.c.l.b16 %v361
        %v375 = vunpack.c.l.b16 %v362
        %v376 = vunpack.c.l.b16 %v363
        %v377 = vunpack.c.l.b16 %v364
        %v378 = vpack.c.b16 %v375, %v374
        %v379 = vpack.c.b16 %v377, %v376
        %vm382 = vcmask 261120
        %v384 = vsel %vm382, %v369, 0
        %386 = vmatprep.subr.bf16.mxu0 0
        %387 = vmatpush1.bf16.msra.mxu0 %v378
        %388 = vmatprep.subr.bf16.mxu0 0
        %389 = vmatpush1.bf16.msra.mxu0 %v379
        %390 = vmatprep.subr.bf16.mxu0 0
        %391 = vmatpush1.bf16.msra.mxu0 0
        %392 = vmatprep.subr.bf16.mxu0 0
        %393 = vmatpush1.bf16.msra.mxu0 0
        %394 = vmatprep.subr.bf16.mxu0 0
        %395 = vmatpush1.bf16.msra.mxu0 0
        %396 = vmatprep.subr.bf16.mxu0 0
        %397 = vmatpush1.bf16.msra.mxu0 0
        %398 = vmatprep.subr.bf16.mxu0 0
        %399 = vmatpush1.bf16.msra.mxu0 0
        %400 = vmatprep.subr.bf16.mxu0 0
        %401 = vmatpush1.bf16.msra.mxu0 0
        %402 = vmatprep.subr.bf16.mxu0 0
        %403 = vmatpush1.bf16.msra.mxu0 0
        %404 = vmatprep.subr.bf16.mxu0 0
        %405 = vmatpush1.bf16.msra.mxu0 0
        %406 = vmatprep.subr.bf16.mxu0 0
        %407 = vmatpush1.bf16.msra.mxu0 0
        %408 = vmatprep.subr.bf16.mxu0 0
        %409 = vmatpush1.bf16.msra.mxu0 0
        %410 = vmatprep.subr.bf16.mxu0 0
        %411 = vmatpush1.bf16.msra.mxu0 0
        %412 = vmatprep.subr.bf16.mxu0 0
        %413 = vmatpush1.bf16.msra.mxu0 0
        %414 = vmatprep.subr.bf16.mxu0 0
        %415 = vmatpush1.bf16.msra.mxu0 0
        %416 = vmatprep.subr.bf16.mxu0 0
        %417 = vmatpush1.bf16.msra.mxu0 0
        %418 = vmatprep.mubr.bf16.mxu0 0
        %419 = vmatmul.mubr.bf16.gmra.mrb[0].mxu0 %v384
        %v420 = vpop.f32.mrb[0].mxu0
        %v421 = vadd.f32 0.0, %v420
        %v422 = vpop.f32.mrb[0].mxu0
        %v423 = vpop.f32.mrb[0].mxu0
        %v424 = vadd.f32 0.0, %v423
        %v425 = vpop.f32.mrb[0].mxu0
        %426 = vdwg.mxu0
        %v427 = vpack.c.bf16 %v424, %v421
        %v429 = vunpack.c.l.b16 %v427
        %v430 = vunpack.c.h.b16 %v427
        %v431 = vpack.c.b16 %v429, %v429
        %v432 = vpack.c.b16 %v430, %v430
        %vm435 = vcmask 257024
        %436 = vst.msk [vmem:[%s339] sm:$0xf] %vm435, %v431
        %437 = vst.msk [vmem:[%s339 + $0x4] sm:$0xf] %vm435, %v432
        %v438 = vld [vmem:[#allocation7] sm:$0xf]
        %v439 = vld [vmem:[#allocation7 + $0x4] sm:$0xf]
        %v440 = vld [vmem:[#allocation7 + $0x8] sm:$0xf]
        %v441 = vld [vmem:[#allocation7 + $0xc] sm:$0xf]
        %v446 = vunpack.c.l.b16 %v438
        %v447 = vunpack.c.l.b16 %v439
        %v448 = vunpack.c.l.b16 %v440
        %v449 = vunpack.c.l.b16 %v441
        %v450 = vpack.c.b16 %v447, %v446
        %v451 = vpack.c.b16 %v449, %v448
        %454 = vmatprep.subr.bf16.mxu0 0
        %455 = vmatpush1.bf16.msra.mxu0 %v450
        %456 = vmatprep.subr.bf16.mxu0 0
        %457 = vmatpush1.bf16.msra.mxu0 %v451
        %458 = vmatprep.subr.bf16.mxu0 0
        %459 = vmatpush1.bf16.msra.mxu0 0
        %460 = vmatprep.subr.bf16.mxu0 0
        %461 = vmatpush1.bf16.msra.mxu0 0
        %462 = vmatprep.subr.bf16.mxu0 0
        %463 = vmatpush1.bf16.msra.mxu0 0
        %464 = vmatprep.subr.bf16.mxu0 0
        %465 = vmatpush1.bf16.msra.mxu0 0
        %466 = vmatprep.subr.bf16.mxu0 0
        %467 = vmatpush1.bf16.msra.mxu0 0
        %468 = vmatprep.subr.bf16.mxu0 0
        %469 = vmatpush1.bf16.msra.mxu0 0
        %470 = vmatprep.subr.bf16.mxu0 0
        %471 = vmatpush1.bf16.msra.mxu0 0
        %472 = vmatprep.subr.bf16.mxu0 0
        %473 = vmatpush1.bf16.msra.mxu0 0
        %474 = vmatprep.subr.bf16.mxu0 0
        %475 = vmatpush1.bf16.msra.mxu0 0
        %476 = vmatprep.subr.bf16.mxu0 0
        %477 = vmatpush1.bf16.msra.mxu0 0
        %478 = vmatprep.subr.bf16.mxu0 0
        %479 = vmatpush1.bf16.msra.mxu0 0
        %480 = vmatprep.subr.bf16.mxu0 0
        %481 = vmatpush1.bf16.msra.mxu0 0
        %482 = vmatprep.subr.bf16.mxu0 0
        %483 = vmatpush1.bf16.msra.mxu0 0
        %484 = vmatprep.subr.bf16.mxu0 0
        %485 = vmatpush1.bf16.msra.mxu0 0
        %486 = vmatprep.mubr.bf16.mxu0 0
        %487 = vmatmul.mubr.bf16.gmra.mrb[0].mxu0 %v384
        %v488 = vpop.f32.mrb[0].mxu0
        %v489 = vadd.f32 0.0, %v488
        %v490 = vpop.f32.mrb[0].mxu0
        %v491 = vpop.f32.mrb[0].mxu0
        %v492 = vadd.f32 0.0, %v491
        %v493 = vpop.f32.mrb[0].mxu0
        %494 = vdwg.mxu0
        %v495 = vpack.c.bf16 %v492, %v489
        %v497 = vunpack.c.l.b16 %v495
        %v498 = vunpack.c.h.b16 %v495
        %v499 = vpack.c.b16 %v497, %v497
        %v500 = vpack.c.b16 %v498, %v498
        %503 = vst.msk [vmem:[%s346] sm:$0xf] %vm435, %v499
        %504 = vst.msk [vmem:[%s346 + $0x4] sm:$0xf] %vm435, %v500
        %v505 = vld [vmem:[#allocation8] sm:$0xf]
        %v506 = vld [vmem:[#allocation8 + $0x4] sm:$0xf]
        %v507 = vld [vmem:[#allocation8 + $0x8] sm:$0xf]
        %v508 = vld [vmem:[#allocation8 + $0xc] sm:$0xf]
        %v513 = vunpack.c.l.b16 %v505
        %v514 = vunpack.c.l.b16 %v506
        %v515 = vunpack.c.l.b16 %v507
        %v516 = vunpack.c.l.b16 %v508
        %v517 = vpack.c.b16 %v514, %v513
        %v518 = vpack.c.b16 %v516, %v515
        %521 = vmatprep.subr.bf16.mxu0 0
        %522 = vmatpush1.bf16.msra.mxu0 %v517
        %523 = vmatprep.subr.bf16.mxu0 0
        %524 = vmatpush1.bf16.msra.mxu0 %v518
        %525 = vmatprep.subr.bf16.mxu0 0
        %526 = vmatpush1.bf16.msra.mxu0 0
        %527 = vmatprep.subr.bf16.mxu0 0
        %528 = vmatpush1.bf16.msra.mxu0 0
        %529 = vmatprep.subr.bf16.mxu0 0
        %530 = vmatpush1.bf16.msra.mxu0 0
        %531 = vmatprep.subr.bf16.mxu0 0
        %532 = vmatpush1.bf16.msra.mxu0 0
        %533 = vmatprep.subr.bf16.mxu0 0
        %534 = vmatpush1.bf16.msra.mxu0 0
        %535 = vmatprep.subr.bf16.mxu0 0
        %536 = vmatpush1.bf16.msra.mxu0 0
        %537 = vmatprep.subr.bf16.mxu0 0
        %538 = vmatpush1.bf16.msra.mxu0 0
        %539 = vmatprep.subr.bf16.mxu0 0
        %540 = vmatpush1.bf16.msra.mxu0 0
        %541 = vmatprep.subr.bf16.mxu0 0
        %542 = vmatpush1.bf16.msra.mxu0 0
        %543 = vmatprep.subr.bf16.mxu0 0
        %544 = vmatpush1.bf16.msra.mxu0 0
        %545 = vmatprep.subr.bf16.mxu0 0
        %546 = vmatpush1.bf16.msra.mxu0 0
        %547 = vmatprep.subr.bf16.mxu0 0
        %548 = vmatpush1.bf16.msra.mxu0 0
        %549 = vmatprep.subr.bf16.mxu0 0
        %550 = vmatpush1.bf16.msra.mxu0 0
        %551 = vmatprep.subr.bf16.mxu0 0
        %552 = vmatpush1.bf16.msra.mxu0 0
        %553 = vmatprep.mubr.bf16.mxu0 0
        %554 = vmatmul.mubr.bf16.gmra.mrb[0].mxu0 %v384
        %v555 = vpop.f32.mrb[0].mxu0
        %v556 = vadd.f32 0.0, %v555
        %v557 = vpop.f32.mrb[0].mxu0
        %v558 = vpop.f32.mrb[0].mxu0
        %v559 = vadd.f32 0.0, %v558
        %v560 = vpop.f32.mrb[0].mxu0
        %561 = vdwg.mxu0
        %v562 = vpack.c.bf16 %v559, %v556
        %v564 = vunpack.c.l.b16 %v562
        %v565 = vunpack.c.h.b16 %v562
        %v566 = vpack.c.b16 %v564, %v564
        %v567 = vpack.c.b16 %v565, %v565
        %570 = vst.msk [vmem:[%s353] sm:$0xf] %vm435, %v566
        %571 = vst.msk [vmem:[%s353 + $0x4] sm:$0xf] %vm435, %v567
        %s572 = sand.u32 %s142, 1
        %s573 = scalar_lea.sflag [#allocation4], %s572
        %s574 = sand.u32 %s142, 1
        %s575 = smul.addr %s574, 8
        %s576 = scalar_lea.vmem [#allocation10], %s575
        %s577 = sand.u32 %s29, 1
        %s578 = scalar_lea.sflag [#allocation12], %s577
        %s579 = sand.u32 %s170, 1
        %s580 = smul.addr %s579, 8
        %s581 = scalar_lea.vmem [#allocation11], %s580
        %s582 = sand.u32 %s29, 1
        %s583 = scalar_lea.sflag [#allocation12], %s582
        %s584 = sand.u32 %s198, 1
        %s585 = smul.addr %s584, 8
        %s586 = scalar_lea.vmem [#allocation13], %s585
        // Predicated region
        $region53: #{tpu_custom_call.1} parent=35 // pred_check
          %p587 = pneg %p152
        $region54: #{tpu_custom_call.1} parent=35 // pred_check_branch
          %589 = sbr.rel (%p587) target = $region56
        $region55: #{tpu_custom_call.1} parent=35 // pred_region
          %s590 = smul.u32 2, %s34
          %s592 = ssub.s32 128, 128
          %593 = vsyncadd %s573, %s592
          %s594 = smul.addr %s33, 2
          %s595 = sadd.s32 %s590, %s594
          %s596 = smul.addr %s595, 64
          %s597 = scalar_lea.hbm %s4, %s596
          %s598 = sshll.u32 %s576, 4
          %s599 = int_to_ptr.vmem [resolvable:$true] %s598
          %604 = dma.vmem_to_hbm [thread:$0]  %s599, 128, %s597, %s573, 64, 64, 4
        $region56: #{tpu_custom_call.1} parent=35 // pred_fallthru
          _
        // Predicated region
        $region57: #{tpu_custom_call.1} parent=35 // pred_check
          %p605 = pneg %p180
        $region58: #{tpu_custom_call.1} parent=35 // pred_check_branch
          %607 = sbr.rel (%p605) target = $region60
        $region59: #{tpu_custom_call.1} parent=35 // pred_region
          %s608 = smul.u32 2, %s34
          %s610 = ssub.s32 128, 128
          %611 = vsyncadd %s578, %s610
          %s612 = smul.addr %s33, 2
          %s613 = sadd.s32 %s608, %s612
          %s614 = smul.addr %s613, 64
          %s615 = scalar_lea.hbm %s5, %s614
          %s616 = sshll.u32 %s581, 4
          %s617 = int_to_ptr.vmem [resolvable:$true] %s616
          %622 = dma.vmem_to_hbm [thread:$0]  %s617, 128, %s615, %s578, 64, 64, 4
        $region60: #{tpu_custom_call.1} parent=35 // pred_fallthru
          _
        // Predicated region
        $region61: #{tpu_custom_call.1} parent=35 // pred_check
          %p623 = pneg %p208
        $region62: #{tpu_custom_call.1} parent=35 // pred_check_branch
          %625 = sbr.rel (%p623) target = $region64
        $region63: #{tpu_custom_call.1} parent=35 // pred_region
          %s626 = smul.u32 2, %s34
          %s628 = ssub.s32 128, 128
          %629 = vsyncadd %s583, %s628
          %s630 = smul.addr %s33, 2
          %s631 = sadd.s32 %s626, %s630
          %s632 = smul.addr %s631, 64
          %s633 = scalar_lea.hbm %s6, %s632
          %s634 = sshll.u32 %s586, 4
          %s635 = int_to_ptr.vmem [resolvable:$true] %s634
          %640 = dma.vmem_to_hbm [thread:$0]  %s635, 128, %s633, %s583, 64, 64, 4
        $region64: #{tpu_custom_call.1} parent=35 // pred_fallthru
          _
      $region36: #{tpu_custom_call.1} parent=5 // pred_fallthru
        _
      %p641 = scmp.le.s32.totalorder 2, %s24
      // Predicated region
      $region65: #{tpu_custom_call.1} parent=5 // pred_check
        %p642 = pneg %p641
      $region66: #{tpu_custom_call.1} parent=5 // pred_check_branch
        %644 = sbr.rel (%p642) target = $region68
      $region67: #{tpu_custom_call.1} parent=5 // pred_region
        %s645 = ssub.s32 %s24, 2
        // Predicated region
        $region69: #{tpu_custom_call.1} parent=67 // pred_check
          %p646 = pneg %p158
        $region70: #{tpu_custom_call.1} parent=67 // pred_check_branch
          %648 = sbr.rel (%p646) target = $region72
        $region71: #{tpu_custom_call.1} parent=67 // pred_region
          %s649 = sand.u32 %s143, 1
          %s650 = scalar_lea.sflag [#allocation4], %s649
          %s651 = sand.u32 %s143, 1
          %s652 = smul.addr %s651, 8
          %s653 = scalar_lea.vmem [#allocation10], %s652
          %654 = dma.done %s650, 128
        $region72: #{tpu_custom_call.1} parent=67 // pred_fallthru
          _
        // Predicated region
        $region73: #{tpu_custom_call.1} parent=67 // pred_check
          %p655 = pneg %p186
        $region74: #{tpu_custom_call.1} parent=67 // pred_check_branch
          %657 = sbr.rel (%p655) target = $region76
        $region75: #{tpu_custom_call.1} parent=67 // pred_region
          %s658 = sand.u32 %s30, 1
          %s659 = scalar_lea.sflag [#allocation12], %s658
          %s660 = sand.u32 %s171, 1
          %s661 = smul.addr %s660, 8
          %s662 = scalar_lea.vmem [#allocation11], %s661
          %663 = dma.done %s659, 128
        $region76: #{tpu_custom_call.1} parent=67 // pred_fallthru
          _
        // Predicated region
        $region77: #{tpu_custom_call.1} parent=67 // pred_check
          %p664 = pneg %p214
        $region78: #{tpu_custom_call.1} parent=67 // pred_check_branch
          %666 = sbr.rel (%p664) target = $region80
        $region79: #{tpu_custom_call.1} parent=67 // pred_region
          %s667 = sand.u32 %s30, 1
          %s668 = scalar_lea.sflag [#allocation12], %s667
          %s669 = sand.u32 %s199, 1
          %s670 = smul.addr %s669, 8
          %s671 = scalar_lea.vmem [#allocation13], %s670
          %672 = dma.done %s668, 128
        $region80: #{tpu_custom_call.1} parent=67 // pred_fallthru
          _
      $region68: #{tpu_custom_call.1} parent=5 // pred_fallthru
        _
    $region6: #{tpu_custom_call.1} parent=1 // loop_footer
      %s28 = sadd.s32 1, %s24
    $region7: #{tpu_custom_call.1} parent=1 // loop_footer_branch
      %23 = sbr.rel target = $region3
    $region8: #{tpu_custom_call.1} parent=1 // loop_exit
      _
    %673 = vsyncpa [#allocation3], 1
    %s674 = scalar_lea.sflag [#allocation3], 1
    %675 = vsyncpa %s674, 1
    %676 = vsyncpa [#allocation6], 1
    %677 = vsyncpa [#allocation9], 1
    %678 = vsyncpa [#allocation4], 1
    %s679 = scalar_lea.sflag [#allocation4], 1
    %680 = vsyncpa %s679, 1
    %681 = vsyncpa [#allocation12], 1
    %s682 = scalar_lea.sflag [#allocation12], 1
    %683 = vsyncpa %s682, 1

</llo_original>
